<compile_context>
chip_gen: v5e
topology: v5e:2x2
jax: 0.10.0
libtpu: 0.0.40
codegen_flags: <defaults>
</compile_context>

<pallas_src>
import math

import jax
import jax.numpy as jnp
from jax.experimental import pallas as pl
from jax.experimental.pallas import tpu as pltpu

DIFF_DIM = 64     # diff_dim in the module
INPUT_DIM = 64    # input_dim in the module
HALF_DIM = DIFF_DIM // 2


def diffcdr_kernel(sb_ref, x_ref, c_ref, fac_ref, ph_ref, w_ref, b_ref, o_ref):
    """One grid step = `sr` super-rows (each super-row packs 2 original rows).

    sb_ref : (sr, 4)   f32  sideband: [t_even, mask_even, t_odd, mask_odd]
    x_ref  : (sr, 128) f32  [x[2j]    | x[2j+1]]
    c_ref  : (sr, 128) f32  [cond[2j] | cond[2j+1]]
    fac_ref: (1, 64)   f32  [f, f]          (f = 32 sinusoid frequencies)
    ph_ref : (1, 64)   f32  [0..0, pi/2..pi/2]
    w_ref  : (256,128) f32  block-diagonal fused weight
    b_ref  : (1, 128)  f32  [b_total | b_total]
    o_ref  : (sr, 128) f32  [out[2j] | out[2j+1]]
    """
    sr = x_ref.shape[0]

    sb = sb_ref[...]
    t_e, m_e = sb[:, 0:1], sb[:, 1:2]        # (sr, 1)
    t_o, m_o = sb[:, 2:3], sb[:, 3:4]

    fac = fac_ref[...]                       # (1, 64)
    ph = ph_ref[...]                         # (1, 64)

    # [sin(t*f) | cos(t*f)] == sin(t*[f,f] + [0,pi/2]); one lane-dense sin.
    sincos = jnp.sin(jnp.concatenate([t_e * fac + ph, t_o * fac + ph], axis=-1))

    # x + cond * mask for both rows of the pair (mask broadcast per half).
    c = c_ref[...]
    hx = x_ref[...] + jnp.concatenate(
        [c[:, :INPUT_DIM] * m_e, c[:, INPUT_DIM:] * m_o], axis=-1)   # (sr, 128)

    # Single fused MXU dot replaces step_emb_linear + linears[0..2].
    lhs = jnp.concatenate([sincos, hx], axis=-1)                     # (sr, 256)
    out = jnp.dot(lhs, w_ref[...], preferred_element_type=jnp.float32) + b_ref[...]
    o_ref[...] = out.astype(o_ref.dtype)


def diffcdr_forward(x, t, cond_emb, cond_mask, params, *, max_super_rows=2048):
    """x: (B,L,64) f32, t: (B,L,1) int, cond_emb: (B,L,64) f32, cond_mask: (B,L)."""
    B, L, D = x.shape
    assert D == INPUT_DIM
    N = B * L

    # ---- exact host-side weight folding (no nonlinearity between Linears) ----
    ws, bs, w0, b0, w1, b1, w2, b2 = params
    W_fused = w0 @ w1 @ w2                              # (64, 64)
    b_fused = (b0 @ w1 + b1) @ w2 + b2                  # (1, 64)
    ws_total = ws @ W_fused                             # (64, 64)
    b_total = bs @ W_fused + b_fused                    # (1, 64)
    Z = jnp.zeros((INPUT_DIM, INPUT_DIM), jnp.float32)
    w_big = jnp.concatenate([
        jnp.concatenate([ws_total, Z], axis=1),
        jnp.concatenate([Z, ws_total], axis=1),
        jnp.concatenate([W_fused, Z], axis=1),
        jnp.concatenate([Z, W_fused], axis=1)], axis=0)           # (256, 128)
    b_big = jnp.concatenate([b_total, b_total], axis=1)           # (1, 128)

    fac = jnp.exp(jnp.arange(HALF_DIM, dtype=jnp.float32)
                  * (-math.log(10000.0) / (HALF_DIM - 1)))
    fac_full = jnp.concatenate([fac, fac]).reshape(1, DIFF_DIM)
    phase = jnp.concatenate(
        [jnp.zeros((HALF_DIM,), jnp.float32),
         jnp.full((HALF_DIM,), math.pi / 2, jnp.float32)]).reshape(1, DIFF_DIM)

    # ---- tiling over super-rows (2 original rows per super-row) ----
    N2 = -(-N // 2)
    n_blocks = max(1, -(-N2 // max_super_rows))
    if n_blocks == 1 and N2 >= 512:
        n_blocks = 2                      # let v7x's second TensorCore help
    if n_blocks > 1 and n_blocks % 2:
        n_blocks += 1                     # balanced split across 2 TCs
    sr = max(8, ((-(-N2 // n_blocks) + 7) // 8) * 8)
    N2_pad = n_blocks * sr
    R = 2 * N2_pad                        # padded original-row count

    def prep(a, k):                       # (N, k) -> (N2_pad, 2k), pad only if needed
        a = a.reshape(N, k)
        if R != N:
            a = jnp.pad(a, ((0, R - N), (0, 0)))
        return a.reshape(N2_pad, 2 * k)

    xf = prep(x.astype(jnp.float32), D)                               # (N2_pad, 128)
    cf = prep(cond_emb.astype(jnp.float32), D)                        # (N2_pad, 128)
    sideband = jnp.concatenate(
        [t.reshape(N, 1).astype(jnp.float32),                         # t <= num_steps: exact in f32
         cond_mask.reshape(N, 1).astype(jnp.float32)], axis=1)        # (N, 2)
    sb = prep(sideband, 2)                                            # (N2_pad, 4)

    row = lambda i: (i, 0)
    rep = lambda i: (0, 0)

    out = pl.pallas_call(
        diffcdr_kernel,
        out_shape=jax.ShapeDtypeStruct((N2_pad, 2 * D), jnp.float32),
        grid=(n_blocks,),
        in_specs=[
            pl.BlockSpec((sr, 4), row),                    # sideband t/mask
            pl.BlockSpec((sr, 2 * D), row),                # x (paired)
            pl.BlockSpec((sr, 2 * D), row),                # cond_embedding (paired)
            pl.BlockSpec((1, DIFF_DIM), rep),              # sinusoid frequencies
            pl.BlockSpec((1, DIFF_DIM), rep),              # phase offsets
            pl.BlockSpec((4 * INPUT_DIM, 2 * INPUT_DIM), rep),   # fused weight
            pl.BlockSpec((1, 2 * INPUT_DIM), rep),         # fused bias
        ],
        out_specs=pl.BlockSpec((sr, 2 * D), row),
        compiler_params=pltpu.CompilerParams(
            dimension_semantics=("parallel",)),
    )(sb, xf, cf, fac_full, phase, w_big, b_big)

    out = out.reshape(R, D)
    if R != N:
        out = out[:N]
    return out.reshape(B, L, D)


def init_params(key):
    """Synthetic weights, shapes matching nn.Linear in the module.

    Stored already transposed: (in_features, out_features), so y = x @ W + b,
    matching PyTorch's y = x @ W_torch.T + b.
    """
    ks = jax.random.split(key, 8)

    def lin(kw, kb, fan_in, fan_out):
        bound = 1.0 / math.sqrt(fan_in)
        w = jax.random.uniform(kw, (fan_in, fan_out), jnp.float32, -bound, bound)
        b = jax.random.uniform(kb, (1, fan_out), jnp.float32, -bound, bound)
        return w, b

    ws, bs = lin(ks[0], ks[1], DIFF_DIM, INPUT_DIM)     # step_emb_linear[0]
    w0, b0 = lin(ks[2], ks[3], INPUT_DIM, DIFF_DIM)     # linears[0]
    w1, b1 = lin(ks[4], ks[5], DIFF_DIM, DIFF_DIM)      # linears[1]
    w2, b2 = lin(ks[6], ks[7], DIFF_DIM, INPUT_DIM)     # linears[2]
    return (ws, bs, w0, b0, w1, b1, w2, b2)


def diffcdr_forward_ref(x, t, cond_emb, cond_mask, params):
    """Pure-JAX, unfused reference of DiffCDR.forward (num_layers = 1)."""
    ws, bs, w0, b0, w1, b1, w2, b2 = params
    ts = t.squeeze(-1).astype(jnp.float32)                       # (B, L)
    fac = jnp.exp(jnp.arange(HALF_DIM, dtype=jnp.float32)
                  * (-math.log(10000.0) / (HALF_DIM - 1)))
    e = ts[:, :, None] * fac[None, None, :]
    temb = jnp.concatenate([jnp.sin(e), jnp.cos(e)], axis=-1)    # (B, L, 64)
    temb = temb @ ws + bs
    h = x + temb + cond_emb * cond_mask[..., None].astype(jnp.float32)
    h = h @ w0 + b0
    h = h @ w1 + b1
    h = h @ w2 + b2
    return h


if __name__ == "__main__":
    B, L, D = 2, 8, INPUT_DIM   # small shapes consistent with the forward

    key = jax.random.PRNGKey(0)
    k_x, k_t, k_c, k_m, k_p = jax.random.split(key, 5)

    x = jax.random.normal(k_x, (B, L, D), jnp.float32)
    t = jax.random.randint(k_t, (B, L, 1), 0, 1000)              # diffusion timestep
    cond_emb = jax.random.normal(k_c, (B, L, D), jnp.float32)
    cond_mask = (jax.random.uniform(k_m, (B, L)) > 0.5).astype(jnp.int32)
    params = init_params(k_p)

    out = diffcdr_forward(x, t, cond_emb, cond_mask, params)
    out = jax.block_until_ready(out)

    ref = diffcdr_forward_ref(x, t, cond_emb, cond_mask, params)
    assert out.shape == (B, L, D)
    err = float(jnp.max(jnp.abs(out - ref)))
    assert jnp.allclose(out, ref, rtol=1e-3, atol=1e-3), err

    # TODO(synk): diffusion_loss_fn / p_sample_loop / getcond_emb / getPreds
    # depend on an external kt-model checkpoint, DPM-Solver, attention and
    # dropout; only forward() is kernelized here.
    print("KERNEL_OK")
</pallas_src>

<mosaic_0001>
module attributes {stable_mosaic.version = 11 : i64} {
  func.func @diffcdr_kernel(%arg0: i32, %arg1: memref<8x4xf32, #tpu.memory_space<vmem>>, %arg2: memref<8x128xf32, #tpu.memory_space<vmem>>, %arg3: memref<8x128xf32, #tpu.memory_space<vmem>>, %arg4: memref<1x64xf32, #tpu.memory_space<vmem>>, %arg5: memref<1x64xf32, #tpu.memory_space<vmem>>, %arg6: memref<256x128xf32, #tpu.memory_space<vmem>>, %arg7: memref<1x128xf32, #tpu.memory_space<vmem>>, %arg8: memref<8x128xf32, #tpu.memory_space<vmem>>) attributes {dimension_semantics = [#tpu.dimension_semantics<parallel>], iteration_bounds = array<i64: 1>, scalar_prefetch = 0 : i64, scratch_operands = 0 : i64, tpu.core_type = #tpu.core_type<tc>, window_params = [{transform_indices = @transform_0, window_bounds = array<i64: 8, 4>}, {transform_indices = @transform_1, window_bounds = array<i64: 8, 128>}, {transform_indices = @transform_2, window_bounds = array<i64: 8, 128>}, {pipeline_mode = #tpu.pipeline_mode<synchronous>, transform_indices = @transform_3, window_bounds = array<i64: 1, 64>}, {pipeline_mode = #tpu.pipeline_mode<synchronous>, transform_indices = @transform_4, window_bounds = array<i64: 1, 64>}, {pipeline_mode = #tpu.pipeline_mode<synchronous>, transform_indices = @transform_5, window_bounds = array<i64: 256, 128>}, {pipeline_mode = #tpu.pipeline_mode<synchronous>, transform_indices = @transform_6, window_bounds = array<i64: 1, 128>}, {transform_indices = @transform_7, window_bounds = array<i64: 8, 128>}]} {
    %c0 = arith.constant 0 : index
    %c0_0 = arith.constant 0 : index
    %0 = vector.load %arg1[%c0, %c0_0] : memref<8x4xf32, #tpu.memory_space<vmem>>, vector<8x4xf32>
    %1 = vector.extract_strided_slice %0 {offsets = [0, 0], sizes = [8, 1], strides = [1, 1]} : vector<8x4xf32> to vector<8x1xf32>
    %2 = vector.extract_strided_slice %0 {offsets = [0, 1], sizes = [8, 1], strides = [1, 1]} : vector<8x4xf32> to vector<8x1xf32>
    %3 = vector.extract_strided_slice %0 {offsets = [0, 2], sizes = [8, 1], strides = [1, 1]} : vector<8x4xf32> to vector<8x1xf32>
    %4 = vector.extract_strided_slice %0 {offsets = [0, 3], sizes = [8, 1], strides = [1, 1]} : vector<8x4xf32> to vector<8x1xf32>
    %c0_1 = arith.constant 0 : index
    %c0_2 = arith.constant 0 : index
    %5 = vector.load %arg4[%c0_1, %c0_2] : memref<1x64xf32, #tpu.memory_space<vmem>>, vector<1x64xf32>
    %c0_3 = arith.constant 0 : index
    %c0_4 = arith.constant 0 : index
    %6 = vector.load %arg5[%c0_3, %c0_4] : memref<1x64xf32, #tpu.memory_space<vmem>>, vector<1x64xf32>
    %7 = vector.broadcast %1 : vector<8x1xf32> to vector<8x64xf32>
    %8 = vector.broadcast %5 : vector<1x64xf32> to vector<8x64xf32>
    %9 = arith.mulf %7, %8 : vector<8x64xf32>
    %10 = vector.broadcast %6 : vector<1x64xf32> to vector<8x64xf32>
    %11 = arith.addf %9, %10 : vector<8x64xf32>
    %12 = vector.broadcast %3 : vector<8x1xf32> to vector<8x64xf32>
    %13 = vector.broadcast %5 : vector<1x64xf32> to vector<8x64xf32>
    %14 = arith.mulf %12, %13 : vector<8x64xf32>
    %15 = vector.broadcast %6 : vector<1x64xf32> to vector<8x64xf32>
    %16 = arith.addf %14, %15 : vector<8x64xf32>
    %17 = tpu.concatenate %11, %16 in 1 : vector<8x64xf32>, vector<8x64xf32> -> vector<8x128xf32>
    %18 = math.sin %17 : vector<8x128xf32>
    %c0_5 = arith.constant 0 : index
    %c0_6 = arith.constant 0 : index
    %19 = vector.load %arg3[%c0_5, %c0_6] : memref<8x128xf32, #tpu.memory_space<vmem>>, vector<8x128xf32>
    %c0_7 = arith.constant 0 : index
    %c0_8 = arith.constant 0 : index
    %20 = vector.load %arg2[%c0_7, %c0_8] : memref<8x128xf32, #tpu.memory_space<vmem>>, vector<8x128xf32>
    %21 = vector.extract_strided_slice %19 {offsets = [0, 0], sizes = [8, 64], strides = [1, 1]} : vector<8x128xf32> to vector<8x64xf32>
    %22 = vector.broadcast %2 : vector<8x1xf32> to vector<8x64xf32>
    %23 = arith.mulf %21, %22 : vector<8x64xf32>
    %24 = vector.extract_strided_slice %19 {offsets = [0, 64], sizes = [8, 64], strides = [1, 1]} : vector<8x128xf32> to vector<8x64xf32>
    %25 = vector.broadcast %4 : vector<8x1xf32> to vector<8x64xf32>
    %26 = arith.mulf %24, %25 : vector<8x64xf32>
    %27 = tpu.concatenate %23, %26 in 1 : vector<8x64xf32>, vector<8x64xf32> -> vector<8x128xf32>
    %28 = arith.addf %20, %27 : vector<8x128xf32>
    %29 = tpu.concatenate %18, %28 in 1 : vector<8x128xf32>, vector<8x128xf32> -> vector<8x256xf32>
    %c0_9 = arith.constant 0 : index
    %c0_10 = arith.constant 0 : index
    %30 = vector.load %arg6[%c0_9, %c0_10] : memref<256x128xf32, #tpu.memory_space<vmem>>, vector<256x128xf32>
    %cst = arith.constant dense<0.000000e+00> : vector<8x128xf32>
    %31 = tpu.matmul %29, %30, %cst {dimension_numbers = #tpu.dot_dimension_numbers<[1], [0], [0], [1], [0, 0, 1, 1], [], []>} : vector<8x256xf32>, vector<256x128xf32>, vector<8x128xf32> -> vector<8x128xf32>
    %c0_11 = arith.constant 0 : index
    %c0_12 = arith.constant 0 : index
    %32 = vector.load %arg7[%c0_11, %c0_12] : memref<1x128xf32, #tpu.memory_space<vmem>>, vector<1x128xf32>
    %33 = vector.broadcast %32 : vector<1x128xf32> to vector<8x128xf32>
    %34 = arith.addf %31, %33 : vector<8x128xf32>
    %c0_13 = arith.constant 0 : index
    %c0_14 = arith.constant 0 : index
    %35 = vector.load %arg8[%c0_13, %c0_14] : memref<8x128xf32, #tpu.memory_space<vmem>>, vector<8x128xf32>
    tpu.vector_store %arg8[%c0_13, %c0_14], %34 {strides = array<i32>} : memref<8x128xf32, #tpu.memory_space<vmem>>, vector<8x128xf32>,
    return
  }
  func.func @transform_0(%arg0: i32) -> (i32, i32) {
    %c0_i32 = arith.constant 0 : i32
    %c0_i32_0 = arith.constant 0 : i32
    return %arg0, %c0_i32 : i32, i32
  }
  func.func @transform_1(%arg0: i32) -> (i32, i32) {
    %c0_i32 = arith.constant 0 : i32
    %c0_i32_0 = arith.constant 0 : i32
    return %arg0, %c0_i32 : i32, i32
  }
  func.func @transform_2(%arg0: i32) -> (i32, i32) {
    %c0_i32 = arith.constant 0 : i32
    %c0_i32_0 = arith.constant 0 : i32
    return %arg0, %c0_i32 : i32, i32
  }
  func.func @transform_3(%arg0: i32) -> (i32, i32) {
    %c0_i32 = arith.constant 0 : i32
    %c0_i32_0 = arith.constant 0 : i32
    %c0_i32_1 = arith.constant 0 : i32
    return %c0_i32, %c0_i32_0 : i32, i32
  }
  func.func @transform_4(%arg0: i32) -> (i32, i32) {
    %c0_i32 = arith.constant 0 : i32
    %c0_i32_0 = arith.constant 0 : i32
    %c0_i32_1 = arith.constant 0 : i32
    return %c0_i32, %c0_i32_0 : i32, i32
  }
  func.func @transform_5(%arg0: i32) -> (i32, i32) {
    %c0_i32 = arith.constant 0 : i32
    %c0_i32_0 = arith.constant 0 : i32
    %c0_i32_1 = arith.constant 0 : i32
    return %c0_i32, %c0_i32_0 : i32, i32
  }
  func.func @transform_6(%arg0: i32) -> (i32, i32) {
    %c0_i32 = arith.constant 0 : i32
    %c0_i32_0 = arith.constant 0 : i32
    %c0_i32_1 = arith.constant 0 : i32
    return %c0_i32, %c0_i32_0 : i32, i32
  }
  func.func @transform_7(%arg0: i32) -> (i32, i32) {
    %c0_i32 = arith.constant 0 : i32
    %c0_i32_0 = arith.constant 0 : i32
    return %arg0, %c0_i32 : i32, i32
  }
}

</mosaic_0001>

<llo_original>
// kernel: tpu_custom_call.1
$region0: #{tpu_custom_call.1}
  #allocation0 [shape = 'u32[]', space=smem, size = 0x4, offset = 0x4, fixed_abs, tag = 'smem constant byte address 0x4 - core index']
  #allocation1 [shape = 'u32[72,128]{1,0:T(1,128)}', space=vmem, size = 0x9000, scoped, tag = 'internal scratch']
  %s0 = inlined_call_operand.vmem [shape: f32[8,4], index: 0, kind: input, shape index: {}]
  %s1 = inlined_call_operand.vmem [shape: f32[8,128], index: 1, kind: input, shape index: {}]
  %s2 = inlined_call_operand.hbm [shape: f32[8,128], index: 2, kind: input, shape index: {}]
  %s3 = inlined_call_operand.vmem [shape: f32[1,64], index: 3, kind: input, shape index: {}]
  %s4 = inlined_call_operand.vmem [shape: f32[1,64], index: 4, kind: input, shape index: {}]
  %s5 = inlined_call_operand.hbm [shape: f32[256,128], index: 5, kind: input, shape index: {}]
  %s6 = inlined_call_operand.vmem [shape: f32[1,128], index: 6, kind: input, shape index: {}]
  %s7 = inlined_call_operand.hbm [shape: f32[8,128], index: 7, kind: output, shape index: {}]
  %s8 = sld [smem:[#allocation0]]
  $region46: #{tpu_custom_call.1} parent=0
    _
  %s10 = ssub.s32 1, %s8
  %s11 = scalar_select 0, %s10, %s8
  $region1: #{tpu_custom_call.1} parent=0
    #allocation2 [shape = 'u8[4096]{0}', space=vmem, size = 0x1000, scoped, tag = 'input window, operand 2, single buffered']
    #allocation3 [shape = 's32[1]{0}', space=sflag, size = 0x4, scoped, tag = 'scoped memory for tpu_custom_call.1']
    #allocation4 [shape = 's32[1]{0}', space=sflag, size = 0x4, scoped, tag = 'scoped memory for tpu_custom_call.1']
    #allocation5 [shape = 'u8[131072]{0}', space=vmem, size = 0x20000, scoped, tag = 'input window, operand 5, single buffered']
    #allocation6 [shape = 's32[1]{0}', space=sflag, size = 0x4, scoped, tag = 'scoped memory for tpu_custom_call.1']
    #allocation7 [shape = 'u8[4096]{0}', space=vmem, size = 0x1000, scoped, tag = 'output window, operand 0, single buffered']
    %12 = vsyncpa [#allocation3], 0
    %13 = vsyncpa [#allocation6], 0
    %14 = vsyncpa [#allocation4], 0
    // Predicated region
    $region2: #{tpu_custom_call.1} parent=1 // pred_check
      _
    $region3: #{tpu_custom_call.1} parent=1 // pred_check_branch
      %16 = sbr.rel (0) target = $region5
    $region4: #{tpu_custom_call.1} parent=1 // pred_region
      _
    $region5: #{tpu_custom_call.1} parent=1 // pred_fallthru
      _
    // Predicated region
    $region6: #{tpu_custom_call.1} parent=1 // pred_check
      _
    $region7: #{tpu_custom_call.1} parent=1 // pred_check_branch
      %18 = sbr.rel (0) target = $region9
    $region8: #{tpu_custom_call.1} parent=1 // pred_region
      _
    $region9: #{tpu_custom_call.1} parent=1 // pred_fallthru
      _
    // Predicated region
    $region10: #{tpu_custom_call.1} parent=1 // pred_check
      _
    $region11: #{tpu_custom_call.1} parent=1 // pred_check_branch
      %20 = sbr.rel (0) target = $region13
    $region12: #{tpu_custom_call.1} parent=1 // pred_region
      %22 = vsyncadd [#allocation3], 0
      %s24 = sshll.u32 %s2, 4
      %s25 = int_to_ptr.hbm [resolvable:$true] %s24
      %s26 = sshll.u32 [#allocation2], 4
      %s27 = int_to_ptr.vmem [resolvable:$true] %s26
      %29 = dma.hbm_to_vmem [thread:$0]  %s25, 128, %s27, [#allocation3]
    $region13: #{tpu_custom_call.1} parent=1 // pred_fallthru
      _
    // Predicated region
    $region14: #{tpu_custom_call.1} parent=1 // pred_check
      _
    $region15: #{tpu_custom_call.1} parent=1 // pred_check_branch
      %31 = sbr.rel (0) target = $region17
    $region16: #{tpu_custom_call.1} parent=1 // pred_region
      _
    $region17: #{tpu_custom_call.1} parent=1 // pred_fallthru
      _
    // Predicated region
    $region18: #{tpu_custom_call.1} parent=1 // pred_check
      _
    $region19: #{tpu_custom_call.1} parent=1 // pred_check_branch
      %33 = sbr.rel (0) target = $region21
    $region20: #{tpu_custom_call.1} parent=1 // pred_region
      _
    $region21: #{tpu_custom_call.1} parent=1 // pred_fallthru
      _
    // Predicated region
    $region22: #{tpu_custom_call.1} parent=1 // pred_check
      _
    $region23: #{tpu_custom_call.1} parent=1 // pred_check_branch
      %35 = sbr.rel (0) target = $region25
    $region24: #{tpu_custom_call.1} parent=1 // pred_region
      %37 = vsyncadd [#allocation6], 0
      %s38 = sshll.u32 %s5, 4
      %s39 = int_to_ptr.hbm [resolvable:$true] %s38
      %s40 = sshll.u32 [#allocation5], 4
      %s41 = int_to_ptr.vmem [resolvable:$true] %s40
      %46 = dma.hbm_to_vmem [thread:$0]  %s39, 4096, %s41, [#allocation6], 128, 128, 8
    $region25: #{tpu_custom_call.1} parent=1 // pred_fallthru
      _
    // Predicated region
    $region26: #{tpu_custom_call.1} parent=1 // pred_check
      _
    $region27: #{tpu_custom_call.1} parent=1 // pred_check_branch
      %48 = sbr.rel (0) target = $region29
    $region28: #{tpu_custom_call.1} parent=1 // pred_region
      _
    $region29: #{tpu_custom_call.1} parent=1 // pred_fallthru
      _
    // Predicated region
    $region30: #{tpu_custom_call.1} parent=1 // pred_check
      _
    $region31: #{tpu_custom_call.1} parent=1 // pred_check_branch
      %50 = sbr.rel (0) target = $region33
    $region32: #{tpu_custom_call.1} parent=1 // pred_region
      %52 = dma.done [#allocation3], 128
    $region33: #{tpu_custom_call.1} parent=1 // pred_fallthru
      _
    // Predicated region
    $region34: #{tpu_custom_call.1} parent=1 // pred_check
      _
    $region35: #{tpu_custom_call.1} parent=1 // pred_check_branch
      %54 = sbr.rel (0) target = $region37
    $region36: #{tpu_custom_call.1} parent=1 // pred_region
      %56 = dma.done [#allocation6], 4096
    $region37: #{tpu_custom_call.1} parent=1 // pred_fallthru
      _
    %v57 = vld [vmem:[%s0] sm:$0xff]
    %v58 = vld [vmem:[%s3] sm:$0x1]
    %v59 = vld [vmem:[%s4] sm:$0x1]
    %61 = vset.pattern.permute.xlu0 0
    %62 = vperm.xlu0 %61, %v57
    %v63 = vpop.permute.xlu0 %62
    %v66 = vperm.slane %v58, 0
    %v68 = vmul.f32 %v63, %v66
    %v70 = vperm.slane %v59, 0
    %v72 = vadd.f32 %v68, %v70
    %73 = vset.pattern.permute.xlu0 2
    %74 = vperm.xlu0 %73, %v57
    %v75 = vpop.permute.xlu0 %74
    %v77 = vmul.f32 %v75, %v66
    %v78 = vadd.f32 %v77, %v70
    %80 = vrot.lane.b32.xlu0 %v78, 64
    %v81 = vpop.permute.xlu0 %80
    %vm83 = vcmask 523264
    %v84 = vsel %vm83, %v72, %v81
    %v85 = vand.u32 2147483647, %v84
    %vm86 = vcmp.le.f32.partialorder %v85, 0.7853982
    %vm87 = vcmp.lt.s32.totalorder %v84, 0
    %v88 = vand.u32 %v84, 2139095040
    %v89 = vshrl.u32 %v88, 23
    %v90 = vsub.s32 %v89, 127
    %v91 = vand.u32 2147483647, %v84
    %v92 = vand.u32 %v91, 8388607
    %v93 = vor.u32 %v92, 8388608
    %v94 = vsub.s32 0, %v93
    %v95 = vadd.s32 %v90, 1
    %vm96 = vcmp.gt.s32.totalorder %v95, 0
    %v97 = vsel %vm96, %v95, 0
    %v98 = vshrl.u32 %v97, 5
    %v99 = vand.u32 %v97, 31
    %v100 = vsub.s32 32, %v99
    %v101 = vshrl.u32 683565275, %v100
    %v102 = vshll.u32 683565275, %v99
    %v103 = vshrl.u32 2475754826, %v100
    %v104 = vor.u32 %v102, %v103
    %v105 = vshll.u32 2475754826, %v99
    %v106 = vshrl.u32 2131351028, %v100
    %v107 = vor.u32 %v105, %v106
    %v108 = vshll.u32 2131351028, %v99
    %v109 = vshrl.u32 2102212464, %v100
    %v110 = vor.u32 %v108, %v109
    %v111 = vshll.u32 2102212464, %v99
    %v112 = vshrl.u32 920167782, %v100
    %v113 = vor.u32 %v111, %v112
    %v114 = vshll.u32 920167782, %v99
    %v115 = vshrl.u32 1326507024, %v100
    %v116 = vor.u32 %v114, %v115
    %vm117 = vcmp.lt.s32.totalorder %v98, 1
    %vm118 = vcmp.lt.s32.totalorder %v98, 2
    %vm119 = vcmp.lt.s32.totalorder %v98, 3
    %vm120 = vcmp.lt.s32.totalorder %v98, 4
    %v121 = vsel %vm117, %v101, %v104
    %v122 = vsel %vm120, %v110, 2102212464
    %v123 = vsel %vm119, %v107, %v122
    %v124 = vsel %vm118, %v121, %v123
    %v125 = vsel %vm117, %v104, %v107
    %v126 = vsel %vm120, %v113, 920167782
    %v127 = vsel %vm119, %v110, %v126
    %v128 = vsel %vm118, %v125, %v127
    %v129 = vsel %vm117, %v107, %v110
    %v130 = vsel %vm120, %v116, 1326507024
    %v131 = vsel %vm119, %v113, %v130
    %v132 = vsel %vm118, %v129, %v131
    %v133 = vshll.u32 %v93, 8
    %v134 = vand.u32 %v133, 65535
    %v135 = vshrl.u32 %v133, 16
    %v136 = vand.u32 %v132, 65535
    %v137 = vshrl.u32 %v132, 16
    %v138 = vmul.u32 %v134, %v136
    %v139 = vmul.u32 %v134, %v137
    %v140 = vmul.u32 %v135, %v136
    %v141 = vmul.u32 %v135, %v137
    %v142 = vshll.u32 %v139, 16
    %v143 = vshrl.u32 %v139, 16
    %v144 = vshll.u32 %v140, 16
    %v145 = vshrl.u32 %v140, 16
    %vm146 = vc.u32 %v138, %v142
    %v147 = vsel %vm146, 1, 0
    %v148 = vadd.s32 %v138, %v142
    %v149 = vadd.s32 %v141, %v147
    %vm150 = vc.u32 %v148, %v144
    %v151 = vsel %vm150, 1, 0
    %v152 = vadd.s32 %v148, %v144
    %v153 = vadd.s32 %v149, %v151
    %v154 = vadd.s32 %v153, %v143
    %v155 = vadd.s32 %v154, %v145
    %v156 = vand.u32 %v133, 65535
    %v157 = vshrl.u32 %v133, 16
    %v158 = vand.u32 %v128, 65535
    %v159 = vshrl.u32 %v128, 16
    %v160 = vmul.u32 %v156, %v158
    %v161 = vmul.u32 %v156, %v159
    %v162 = vmul.u32 %v157, %v158
    %v163 = vmul.u32 %v157, %v159
    %v164 = vshll.u32 %v161, 16
    %v165 = vshrl.u32 %v161, 16
    %v166 = vshll.u32 %v162, 16
    %v167 = vshrl.u32 %v162, 16
    %vm168 = vc.u32 %v160, %v164
    %v169 = vsel %vm168, 1, 0
    %v170 = vadd.s32 %v160, %v164
    %v171 = vadd.s32 %v163, %v169
    %vm172 = vc.u32 %v170, %v166
    %v173 = vsel %vm172, 1, 0
    %v174 = vadd.s32 %v170, %v166
    %v175 = vadd.s32 %v171, %v173
    %v176 = vadd.s32 %v175, %v165
    %v177 = vadd.s32 %v176, %v167
    %v178 = vmul.u32 %v133, %v124
    %v179 = vadd.s32 %v155, %v174
    %vm180 = vc.u32 %v155, %v174
    %v181 = vadd.s32 %v177, 1
    %v182 = vsel %vm180, %v181, %v177
    %v183 = vadd.s32 %v178, %v182
    %v184 = vadd.s32 %v183, 536870912
    %v185 = vshrl.u32 %v184, 30
    %v186 = vshll.u32 %v185, 30
    %v187 = vsub.s32 %v183, %v186
    %vm188 = vcmp.lt.s32.totalorder %v187, 0
    %v189 = vsub.s32 0, %v187
    %v190 = vsel %vm188, %v189, %v187
    %v191 = vclz %v190
    %v192 = vsub.s32 %v191, 2
    %vm193 = vcmp.gt.s32.totalorder 0, %v192
    %v194 = vsel %vm193, 0, %v192
    %v195 = vsub.s32 32, %v194
    %v196 = vshll.u32 %v187, %v194
    %v197 = vshrl.u32 %v179, %v195
    %v198 = vor.u32 %v196, %v197
    %v199 = vsub.s32 4294967266, %v194
    %v200 = vadd.s32 %v199, 127
    %v201 = vshll.u32 %v200, 23
    %v202 = vor.u32 4788187, %v201
    %v203 = vand.u32 2147483647, %v202
    %v205 = vcvt.s32.f32 %v198
    %v206 = vmul.f32 %v205, %v203
    %v207 = vxor.u32 %v206, 2147483648
    %v208 = vsel %vm87, %v207, %v206
    %v209 = vsub.s32 4, %v185
    %v210 = vsel %vm87, %v209, %v185
    %v211 = vsel %vm86, %v84, %v208
    %v212 = vsel %vm86, 0, %v210
    %v213 = vmul.f32 %v211, %v211
    %v214 = vmul.f32 %v213, -0.001358992
    %v215 = vadd.f32 %v214, 0.041655596
    %v216 = vmul.f32 %v213, %v215
    %v217 = vadd.f32 %v216, -0.4999988
    %v218 = vmul.f32 %v213, %v217
    %v219 = vadd.f32 1.0, %v218
    %v220 = vmul.f32 %v211, %v211
    %v221 = vmul.f32 %v220, -0.00019511016
    %v222 = vadd.f32 %v221, 0.008332121
    %v223 = vmul.f32 %v220, %v222
    %v224 = vadd.f32 %v223, -0.16666654
    %v225 = vmul.f32 %v220, %v224
    %v226 = vadd.f32 %v225, 1.0
    %v227 = vmul.f32 %v226, %v211
    %vm228 = vweird.f32 %v84
    %v229 = vadd.s32 %v212, 3
    %v230 = vand.u32 %v229, 3
    %vm231 = vcmp.lt.s32.totalorder %v230, 2
    %vm232 = vcmp.eq.s32.totalorder %v230, 0
    %v233 = vxor.u32 %v227, 2147483648
    %v234 = vsel %vm232, %v219, %v233
    %vm235 = vcmp.eq.s32.totalorder %v230, 2
    %v236 = vxor.u32 %v219, 2147483648
    %v237 = vsel %vm235, %v236, %v227
    %v238 = vsel %vm231, %v234, %v237
    %v239 = vsel %vm228, nan, %v238
    %v240 = vld [vmem:[#allocation2] sm:$0xff]
    %v241 = vld [vmem:[%s1] sm:$0xff]
    %242 = vset.pattern.permute.xlu0 1
    %243 = vperm.xlu0 %242, %v57
    %v244 = vpop.permute.xlu0 %243
    %v246 = vmul.f32 %v240, %v244
    %247 = vset.pattern.permute.xlu0 3
    %248 = vperm.xlu0 %247, %v57
    %v249 = vpop.permute.xlu0 %248
    %v251 = vmul.f32 %v240, %v249
    %v252 = vsel %vm83, %v246, %v251
    %v253 = vadd.f32 %v241, %v252
    %v254 = vld [vmem:[#allocation5] sm:$0xff]
    %v255 = vld [vmem:[#allocation5 + $0x8] sm:$0xff]
    %v256 = vld [vmem:[#allocation5 + $0x10] sm:$0xff]
    %v257 = vld [vmem:[#allocation5 + $0x18] sm:$0xff]
    %v258 = vld [vmem:[#allocation5 + $0x20] sm:$0xff]
    %v259 = vld [vmem:[#allocation5 + $0x28] sm:$0xff]
    %v260 = vld [vmem:[#allocation5 + $0x30] sm:$0xff]
    %v261 = vld [vmem:[#allocation5 + $0x38] sm:$0xff]
    %v262 = vld [vmem:[#allocation5 + $0x40] sm:$0xff]
    %v263 = vld [vmem:[#allocation5 + $0x48] sm:$0xff]
    %v264 = vld [vmem:[#allocation5 + $0x50] sm:$0xff]
    %v265 = vld [vmem:[#allocation5 + $0x58] sm:$0xff]
    %v266 = vld [vmem:[#allocation5 + $0x60] sm:$0xff]
    %v267 = vld [vmem:[#allocation5 + $0x68] sm:$0xff]
    %v268 = vld [vmem:[#allocation5 + $0x70] sm:$0xff]
    %v269 = vld [vmem:[#allocation5 + $0x78] sm:$0xff]
    %v270 = vld [vmem:[#allocation5 + $0x80] sm:$0xff]
    %v271 = vld [vmem:[#allocation5 + $0x88] sm:$0xff]
    %v272 = vld [vmem:[#allocation5 + $0x90] sm:$0xff]
    %v273 = vld [vmem:[#allocation5 + $0x98] sm:$0xff]
    %v274 = vld [vmem:[#allocation5 + $0xa0] sm:$0xff]
    %v275 = vld [vmem:[#allocation5 + $0xa8] sm:$0xff]
    %v276 = vld [vmem:[#allocation5 + $0xb0] sm:$0xff]
    %v277 = vld [vmem:[#allocation5 + $0xb8] sm:$0xff]
    %v278 = vld [vmem:[#allocation5 + $0xc0] sm:$0xff]
    %v279 = vld [vmem:[#allocation5 + $0xc8] sm:$0xff]
    %v280 = vld [vmem:[#allocation5 + $0xd0] sm:$0xff]
    %v281 = vld [vmem:[#allocation5 + $0xd8] sm:$0xff]
    %v282 = vld [vmem:[#allocation5 + $0xe0] sm:$0xff]
    %v283 = vld [vmem:[#allocation5 + $0xe8] sm:$0xff]
    %v284 = vld [vmem:[#allocation5 + $0xf0] sm:$0xff]
    %v285 = vld [vmem:[#allocation5 + $0xf8] sm:$0xff]
    %v286 = vld [vmem:[%s6] sm:$0x1]
    %v288 = vperm.slane %v286, 0
    %290 = vmatpush.msra.mxu0 %v269
    %291 = vmatpush.msra.mxu0 %v268
    %292 = vmatpush.msra.mxu0 %v267
    %293 = vmatpush.msra.mxu0 %v266
    %294 = vmatpush.msra.mxu0 %v265
    %295 = vmatpush.msra.mxu0 %v264
    %296 = vmatpush.msra.mxu0 %v263
    %297 = vmatpush.msra.mxu0 %v262
    %298 = vmatpush.msra.mxu0 %v261
    %299 = vmatpush.msra.mxu0 %v260
    %300 = vmatpush.msra.mxu0 %v259
    %301 = vmatpush.msra.mxu0 %v258
    %302 = vmatpush.msra.mxu0 %v257
    %303 = vmatpush.msra.mxu0 %v256
    %304 = vmatpush.msra.mxu0 %v255
    %305 = vmatpush.msra.mxu0 %v254
    %306 = vmatmul.f32.gmra.mxu0 %v239
    %v307 = vpop.f32.mrf.mxu0
    %v308 = vadd.f32 %v288, %v307
    %309 = vdwg.mxu0
    %310 = vmatpush.msra.mxu0 %v285
    %311 = vmatpush.msra.mxu0 %v284
    %312 = vmatpush.msra.mxu0 %v283
    %313 = vmatpush.msra.mxu0 %v282
    %314 = vmatpush.msra.mxu0 %v281
    %315 = vmatpush.msra.mxu0 %v280
    %316 = vmatpush.msra.mxu0 %v279
    %317 = vmatpush.msra.mxu0 %v278
    %318 = vmatpush.msra.mxu0 %v277
    %319 = vmatpush.msra.mxu0 %v276
    %320 = vmatpush.msra.mxu0 %v275
    %321 = vmatpush.msra.mxu0 %v274
    %322 = vmatpush.msra.mxu0 %v273
    %323 = vmatpush.msra.mxu0 %v272
    %324 = vmatpush.msra.mxu0 %v271
    %325 = vmatpush.msra.mxu0 %v270
    %326 = vmatmul.f32.gmra.mxu0 %v253
    %v327 = vpop.f32.mrf.mxu0
    %v328 = vadd.f32 %v308, %v327
    %329 = vdwg.mxu0
    %330 = vst [vmem:[#allocation7] sm:$0xff] %v328
    // Predicated region
    $region38: #{tpu_custom_call.1} parent=1 // pred_check
      _
    $region39: #{tpu_custom_call.1} parent=1 // pred_check_branch
      %332 = sbr.rel (0) target = $region41
    $region40: #{tpu_custom_call.1} parent=1 // pred_region
      %334 = vsyncadd [#allocation4], 0
      %s336 = sshll.u32 [#allocation7], 4
      %s337 = int_to_ptr.vmem [resolvable:$true] %s336
      %s338 = sshll.u32 %s7, 4
      %s339 = int_to_ptr.hbm [resolvable:$true] %s338
      %341 = dma.vmem_to_hbm [thread:$0]  %s337, 128, %s339, [#allocation4]
    $region41: #{tpu_custom_call.1} parent=1 // pred_fallthru
      _
    // Predicated region
    $region42: #{tpu_custom_call.1} parent=1 // pred_check
      _
    $region43: #{tpu_custom_call.1} parent=1 // pred_check_branch
      %343 = sbr.rel (0) target = $region45
    $region44: #{tpu_custom_call.1} parent=1 // pred_region
      %345 = dma.done [#allocation4], 128
    $region45: #{tpu_custom_call.1} parent=1 // pred_fallthru
      _
    %346 = vsyncpa [#allocation3], 1
    %347 = vsyncpa [#allocation6], 1
    %348 = vsyncpa [#allocation4], 1

</llo_original>
